<compile_context>
chip_gen: v7x
topology: tpu7x:2x2x1
jax: 0.10.0
libtpu: 0.0.40
codegen_flags: <defaults>
</compile_context>

<pallas_src>
import jax
import jax.numpy as jnp
from jax.experimental import pallas as pl
from jax.experimental.pallas import tpu as pltpu


_TARGET_BLOCK_BYTES = 8 * 1024 * 1024   # ~8 MiB per tile (per largest operand)
_VMEM_LIMIT_BYTES = 48 * 1024 * 1024    # 2x in + 2x out tiles ~= 32 MiB + headroom


def _norm_kernel(x_ref, scale_ref, bias_ref, out_ref):
    # x_ref/out_ref: (row_blk, lane_blk) tile of the flattened image.
    # scale_ref/bias_ref: (row_blk, 1) per-row (= per (n, c)) affine params,
    # broadcast across the lane axis by the VPU.
    x = x_ref[...].astype(jnp.float32)
    s = scale_ref[...]
    b = bias_ref[...]
    out_ref[...] = (x * s + b).astype(out_ref.dtype)


def _round_up(v, m):
    return ((v + m - 1) // m) * m


def _pick_blocks(rows, lanes, itemsize, target_bytes=_TARGET_BLOCK_BYTES):
    # Lane (last) axis: prefer the full row (fully contiguous DMA, no lane
    # grid axis, scale/bias fetched once per row block).  Only split into
    # multiple-of-128 tiles when a full row is too wide to leave room for
    # >= 8 sublanes inside the target tile size.
    if lanes <= 128 or lanes * itemsize * 8 <= target_bytes:
        lane_blk = lanes
    else:
        lane_blk = max(128, (target_bytes // (8 * itemsize) // 128) * 128)
        lane_blk = min(lane_blk, lanes)

    # Row (sublane) axis: multiple of 8 sized toward the target tile bytes.
    # The cdiv grid handles a partial last block; no full-extent fallback
    # that could produce one giant block for awkward shapes.
    if rows <= 8:
        row_blk = rows  # full extent (legal even if not a multiple of 8)
    else:
        max_rows = max(8, target_bytes // (lane_blk * itemsize))
        row_blk = max(8, (min(rows, max_rows) // 8) * 8)
        # Keep >= 2 grid steps along the parallel row axis whenever the row
        # count allows it, so v7x's two TensorCores both get work.
        half = _round_up(pl.cdiv(rows, 2), 8)
        if half < rows:
            row_blk = min(row_blk, half)
    return row_blk, lane_blk


def normalization(img, mean, std):
    """Pallas TPU equivalent of (img - mean.view(-1,1,1)) / std.view(-1,1,1)."""
    N, C, H, W = img.shape
    R, L = N * C, H * W

    # Promote integer images to float output (truncating would be wrong).
    out_dtype = img.dtype if jnp.issubdtype(img.dtype, jnp.floating) else jnp.float32

    # Lane-dense flattened view: row r <-> (n = r // C, c = r % C).
    x2d = img.reshape(R, L)

    # Fold (x - mean) / std into one fma: x * (1/std) + (-mean/std).
    # Computed once in f32; rounding differs from a literal divide by <=1 ulp.
    mean_f = mean.reshape(-1).astype(jnp.float32)
    std_f = std.reshape(-1).astype(jnp.float32)
    inv_std = 1.0 / std_f
    scale = jnp.tile(inv_std, N).reshape(R, 1)
    bias = jnp.tile(-mean_f * inv_std, N).reshape(R, 1)

    # Size blocks by the largest per-element operand so in+out both fit.
    itemsize = max(jnp.dtype(img.dtype).itemsize, jnp.dtype(out_dtype).itemsize)
    row_blk, lane_blk = _pick_blocks(R, L, itemsize)
    grid = (pl.cdiv(R, row_blk), pl.cdiv(L, lane_blk))

    x_spec = pl.BlockSpec((row_blk, lane_blk), lambda i, j: (i, j))
    p_spec = pl.BlockSpec((row_blk, 1), lambda i, j: (i, 0))

    out2d = pl.pallas_call(
        _norm_kernel,
        out_shape=jax.ShapeDtypeStruct((R, L), out_dtype),
        grid=grid,
        in_specs=[x_spec, p_spec, p_spec],
        out_specs=x_spec,
        compiler_params=pltpu.CompilerParams(
            dimension_semantics=("parallel", "parallel"),
            vmem_limit_bytes=_VMEM_LIMIT_BYTES,
        ),
    )(x2d, scale, bias)

    return out2d.reshape(N, C, H, W)


if __name__ == "__main__":
    key = jax.random.PRNGKey(0)
    N, C, H, W = 2, 4, 16, 16

    img = jax.random.uniform(key, (N, C, H, W), dtype=jnp.float32)

    # Deterministic "ImageNet-style" parameters for C=4 channels.
    mean = jnp.array([0.485, 0.456, 0.406, 0.500], dtype=jnp.float32)
    std = jnp.array([0.229, 0.224, 0.225, 0.250], dtype=jnp.float32)

    out = jax.block_until_ready(normalization(img, mean, std))

    # Reference check (plain JAX, mirrors the PyTorch broadcast semantics).
    ref = (img - mean[None, :, None, None]) / std[None, :, None, None]
    assert out.shape == ref.shape and out.dtype == ref.dtype
    assert jnp.allclose(out, ref, rtol=1e-5, atol=1e-6), float(
        jnp.max(jnp.abs(out - ref))
    )

    print("KERNEL_OK")
</pallas_src>

<mosaic_0001>
module attributes {stable_mosaic.version = 11 : i64} {
  func.func @_norm_kernel(%arg0: i32, %arg1: i32, %arg2: memref<8x256xf32, #tpu.memory_space<vmem>>, %arg3: memref<8x1xf32, #tpu.memory_space<vmem>>, %arg4: memref<8x1xf32, #tpu.memory_space<vmem>>, %arg5: memref<8x256xf32, #tpu.memory_space<vmem>>) attributes {dimension_semantics = [#tpu.dimension_semantics<parallel>, #tpu.dimension_semantics<parallel>], iteration_bounds = array<i64: 1, 1>, scalar_prefetch = 0 : i64, scratch_operands = 0 : i64, tpu.core_type = #tpu.core_type<tc>, window_params = [{transform_indices = @transform_0, window_bounds = array<i64: 8, 256>}, {transform_indices = @transform_1, window_bounds = array<i64: 8, 1>}, {transform_indices = @transform_2, window_bounds = array<i64: 8, 1>}, {transform_indices = @transform_3, window_bounds = array<i64: 8, 256>}]} {
    %c0 = arith.constant 0 : index
    %c0_0 = arith.constant 0 : index
    %0 = vector.load %arg2[%c0, %c0_0] : memref<8x256xf32, #tpu.memory_space<vmem>>, vector<8x256xf32>
    %c0_1 = arith.constant 0 : index
    %c0_2 = arith.constant 0 : index
    %1 = vector.load %arg3[%c0_1, %c0_2] : memref<8x1xf32, #tpu.memory_space<vmem>>, vector<8x1xf32>
    %c0_3 = arith.constant 0 : index
    %c0_4 = arith.constant 0 : index
    %2 = vector.load %arg4[%c0_3, %c0_4] : memref<8x1xf32, #tpu.memory_space<vmem>>, vector<8x1xf32>
    %3 = vector.broadcast %1 : vector<8x1xf32> to vector<8x256xf32>
    %4 = arith.mulf %0, %3 : vector<8x256xf32>
    %5 = vector.broadcast %2 : vector<8x1xf32> to vector<8x256xf32>
    %6 = arith.addf %4, %5 : vector<8x256xf32>
    %c0_5 = arith.constant 0 : index
    %c0_6 = arith.constant 0 : index
    %7 = vector.load %arg5[%c0_5, %c0_6] : memref<8x256xf32, #tpu.memory_space<vmem>>, vector<8x256xf32>
    tpu.vector_store %arg5[%c0_5, %c0_6], %6 {strides = array<i32>} : memref<8x256xf32, #tpu.memory_space<vmem>>, vector<8x256xf32>,
    return
  }
  func.func @transform_0(%arg0: i32, %arg1: i32) -> (i32, i32) {
    %c0_i32 = arith.constant 0 : i32
    return %arg0, %arg1 : i32, i32
  }
  func.func @transform_1(%arg0: i32, %arg1: i32) -> (i32, i32) {
    %c0_i32 = arith.constant 0 : i32
    %c0_i32_0 = arith.constant 0 : i32
    return %arg0, %c0_i32 : i32, i32
  }
  func.func @transform_2(%arg0: i32, %arg1: i32) -> (i32, i32) {
    %c0_i32 = arith.constant 0 : i32
    %c0_i32_0 = arith.constant 0 : i32
    return %arg0, %c0_i32 : i32, i32
  }
  func.func @transform_3(%arg0: i32, %arg1: i32) -> (i32, i32) {
    %c0_i32 = arith.constant 0 : i32
    return %arg0, %arg1 : i32, i32
  }
}

</mosaic_0001>

<llo_original>
// kernel: tpu_custom_call.1
$region0: #{tpu_custom_call.1}
  #allocation0 [shape = 'u32[]', space=smem, size = 0x4, offset = 0x4, fixed_abs, tag = 'smem constant byte address 0x4 - core index']
  #allocation1 [shape = 'u32[144,128]{1,0:T(1,128)}', space=vmem, size = 0x12000, scoped, tag = 'internal scratch']
  %s0 = inlined_call_operand.vmem [shape: f32[8,256], index: 0, kind: input, shape index: {}]
  %s1 = inlined_call_operand.vmem [shape: f32[8,1], index: 1, kind: input, shape index: {}]
  %s2 = inlined_call_operand.vmem [shape: f32[8,1], index: 2, kind: input, shape index: {}]
  %s3 = inlined_call_operand.hbm [shape: f32[8,256], index: 3, kind: output, shape index: {}]
  %s4 = sld [smem:[#allocation0]]
  $region22: #{tpu_custom_call.1} parent=0
    _
  %s6 = ssub.s32 1, %s4
  %s7 = scalar_select 0, %s6, %s4
  $region1: #{tpu_custom_call.1} parent=0
    #allocation2 [shape = 'u8[8192]{0}', space=vmem, size = 0x2000, scoped, tag = 'output window, operand 0, single buffered']
    #allocation3 [shape = 's32[1]{0}', space=sflag, size = 0x4, scoped, tag = 'scoped memory for tpu_custom_call.1']
    %8 = vsyncpa [#allocation3], 0
    // Predicated region
    $region2: #{tpu_custom_call.1} parent=1 // pred_check
      _
    $region3: #{tpu_custom_call.1} parent=1 // pred_check_branch
      %10 = sbr.rel (0) target = $region5
    $region4: #{tpu_custom_call.1} parent=1 // pred_region
      _
    $region5: #{tpu_custom_call.1} parent=1 // pred_fallthru
      _
    // Predicated region
    $region6: #{tpu_custom_call.1} parent=1 // pred_check
      _
    $region7: #{tpu_custom_call.1} parent=1 // pred_check_branch
      %12 = sbr.rel (0) target = $region9
    $region8: #{tpu_custom_call.1} parent=1 // pred_region
      _
    $region9: #{tpu_custom_call.1} parent=1 // pred_fallthru
      _
    // Predicated region
    $region10: #{tpu_custom_call.1} parent=1 // pred_check
      _
    $region11: #{tpu_custom_call.1} parent=1 // pred_check_branch
      %14 = sbr.rel (0) target = $region13
    $region12: #{tpu_custom_call.1} parent=1 // pred_region
      _
    $region13: #{tpu_custom_call.1} parent=1 // pred_fallthru
      _
    %v15 = vld [vmem:[%s0] sm:$0xff]
    %v16 = vld [vmem:[%s0 + $0x8] sm:$0xff]
    %v17 = vld [vmem:[%s1] sm:$0xff]
    %v18 = vld [vmem:[%s2] sm:$0xff]
    %20 = vset.pattern.permute.xlu0 0
    %21 = vperm.xlu0 %20, %v17
    %v22 = vpop.permute.xlu0 %21
    %v24 = vmul.f32 %v15, %v22
    %v25 = vmul.f32 %v16, %v22
    %27 = vset.pattern.permute.xlu0 0
    %28 = vperm.xlu0 %27, %v18
    %v29 = vpop.permute.xlu0 %28
    %v31 = vadd.f32 %v24, %v29
    %v32 = vadd.f32 %v25, %v29
    %33 = vst [vmem:[#allocation2] sm:$0xff] %v31
    %34 = vst [vmem:[#allocation2 + $0x8] sm:$0xff] %v32
    // Predicated region
    $region14: #{tpu_custom_call.1} parent=1 // pred_check
      _
    $region15: #{tpu_custom_call.1} parent=1 // pred_check_branch
      %36 = sbr.rel (0) target = $region17
    $region16: #{tpu_custom_call.1} parent=1 // pred_region
      %s38 = ssub.s32 256, 256
      %39 = vsyncadd [#allocation3], %s38
      %s41 = sshll.u32 [#allocation2], 4
      %s42 = int_to_ptr.vmem [resolvable:$true] %s41
      %44 = dma.vmem_to_hbm [thread:$0]  %s42, 256, %s3, [#allocation3]
    $region17: #{tpu_custom_call.1} parent=1 // pred_fallthru
      _
    // Predicated region
    $region18: #{tpu_custom_call.1} parent=1 // pred_check
      _
    $region19: #{tpu_custom_call.1} parent=1 // pred_check_branch
      %46 = sbr.rel (0) target = $region21
    $region20: #{tpu_custom_call.1} parent=1 // pred_region
      %47 = dma.done [#allocation3], 256
    $region21: #{tpu_custom_call.1} parent=1 // pred_fallthru
      _
    %48 = vsyncpa [#allocation3], 1

</llo_original>
